<compile_context>
chip_gen: v5e
topology: v5e:2x2
jax: 0.10.0
libtpu: 0.0.40
codegen_flags: <defaults>
</compile_context>

<pallas_src>
from functools import partial

import jax
import jax.numpy as jnp
from jax import lax
from jax.experimental import pallas as pl
from jax.experimental.pallas import tpu as pltpu

_MIB = 1 << 20


def _round_up(v, m):
    return (v + m - 1) // m * m


def _mask_k_tail(slab, k_block, tk, k_total):
    """Zero the columns of a (rows, tk) K-slice that lie at/after k_total."""
    col = lax.broadcasted_iota(jnp.int32, slab.shape, dimension=1) + k_block * tk
    return jnp.where(col < k_total, slab, jnp.zeros_like(slab))


# --------------------- resident-G path (X read exactly once) ---------------------

def _gram_resident_kernel(x_ref, o_ref, *, inv_total, k_total, tk,
                          mask_tail, compute_dtype):
    """Grid step k of G = X @ X^T / total with G resident in VMEM.

    x_ref: (M, tk)  K-slice of all rows of X
    o_ref: (M, M)   f32 accumulator, resident across the (only) grid axis
    """
    k = pl.program_id(0)

    @pl.when(k == 0)
    def _():
        o_ref[...] = jnp.zeros_like(o_ref)

    slab = x_ref[...]
    if mask_tail:  # static (trace-time) flag: no masking code when K % tk == 0
        slab = _mask_k_tail(slab, k, tk, k_total)
    if compute_dtype is not None:
        slab = slab.astype(compute_dtype)

    # Contract dim 1 of both operands: X_slab @ X_slab^T without an XLU transpose.
    o_ref[...] += lax.dot_general(
        slab, slab,
        dimension_numbers=(((1,), (1,)), ((), ())),
        preferred_element_type=jnp.float32,
    )

    @pl.when(k == pl.num_programs(0) - 1)
    def _():
        o_ref[...] *= inv_total


# --------------------- large-M fallback: (row_block, k) grid ---------------------

def _gram_rowblock_kernel(x_row_ref, x_col_ref, o_ref, *, inv_total, k_total,
                          tk, mask_tail, compute_dtype):
    """x_row_ref: (tm, tk), x_col_ref: (M, tk), o_ref: (tm, M) resident over k."""
    k = pl.program_id(1)

    @pl.when(k == 0)
    def _():
        o_ref[...] = jnp.zeros_like(o_ref)

    rows = x_row_ref[...]
    cols = x_col_ref[...]
    if mask_tail:
        rows = _mask_k_tail(rows, k, tk, k_total)
        cols = _mask_k_tail(cols, k, tk, k_total)
    if compute_dtype is not None:
        rows = rows.astype(compute_dtype)
        cols = cols.astype(compute_dtype)

    o_ref[...] += lax.dot_general(
        rows, cols,
        dimension_numbers=(((1,), (1,)), ((), ())),
        preferred_element_type=jnp.float32,
    )

    @pl.when(k == pl.num_programs(1) - 1)
    def _():
        o_ref[...] *= inv_total


# ----------------------------------- wrapper -----------------------------------

def gram_matrix(x, *, compute_dtype=None, max_tk=2048, use_resident=None):
    """Pallas equivalent of GramMatrix.forward for an NCHW tensor x.

    compute_dtype: optional dtype (e.g. jnp.bfloat16) for the matmul operands,
                   cast inside the kernel (accumulation stays f32). None keeps
                   x.dtype (exact f32 path).
    max_tk:        cap on the K tile (multiple of 128).
    use_resident:  force (True/False) the resident-full-G path; None = auto.
    """
    a, b, c, d = x.shape
    M = a * b
    K = c * d
    inv_total = 1.0 / float(a * b * c * d)

    # Layout-only flatten: no pad, no cast -> no extra HBM copies of X.
    feat = x.reshape(M, K)
    itemsize = feat.dtype.itemsize

    # VMEM budget sized against v7x's 64 MiB physical VMEM (smallest of the
    # three generations); v5e/v6e have 128 MiB so this is always safe.
    vmem_budget = 40 * _MIB
    out_bytes = 2 * M * M * 4                 # resident f32 G (assume 2 buffers)
    in_bytes_per_col = 2 * M * itemsize       # double-buffered (M, tk) slab, per column

    resident_ok = out_bytes + in_bytes_per_col * max(min(K, 256), 128) <= vmem_budget
    if use_resident is None:
        use_resident = resident_ok

    if use_resident:
        # Largest K tile that fits the remaining VMEM (multiple of 128, capped).
        tk_fit = (vmem_budget - out_bytes) // max(in_bytes_per_col, 1)
        tk = min(int(max_tk), int(tk_fit))
        tk = max(128, (tk // 128) * 128)
        if K <= tk:
            tk = K                            # single block == full K dim, no masking
        nk = pl.cdiv(K, tk)
        mask_tail = (K % tk) != 0

        vmem_limit = out_bytes + in_bytes_per_col * tk + 8 * _MIB
        vmem_limit = int(min(max(vmem_limit, 32 * _MIB), 56 * _MIB))

        out = pl.pallas_call(
            partial(_gram_resident_kernel, inv_total=inv_total, k_total=K,
                    tk=tk, mask_tail=mask_tail, compute_dtype=compute_dtype),
            out_shape=jax.ShapeDtypeStruct((M, M), jnp.float32),
            grid_spec=pltpu.PrefetchScalarGridSpec(
                num_scalar_prefetch=0,
                grid=(nk,),
                in_specs=[pl.BlockSpec((M, tk), lambda k: (0, k))],
                # Constant index -> resident f32 accumulator across the reduction.
                out_specs=pl.BlockSpec((M, M), lambda k: (0, 0)),
            ),
            compiler_params=pltpu.CompilerParams(
                dimension_semantics=("arbitrary",),
                vmem_limit_bytes=vmem_limit,
            ),
        )(feat)
    else:
        # TODO(synk): exploit Gram symmetry (only i <= j block pairs) here; it
        # halves MXU work and column-slab HBM reads in the large-M regime.
        tm = 256 if M >= 256 else _round_up(M, 8)
        tk = 512
        while tk > 128 and 2 * M * tk * itemsize > 24 * _MIB:
            tk //= 2
        if K <= tk:
            tk = K
        nk = pl.cdiv(K, tk)
        mask_tail = (K % tk) != 0
        grid = (pl.cdiv(M, tm), nk)

        vmem_limit = (2 * tm * tk * itemsize          # row block (double-buffered)
                      + 2 * M * tk * itemsize         # column slab (double-buffered)
                      + 2 * tm * M * 4                # resident f32 output block
                      + 8 * _MIB)
        vmem_limit = int(min(max(vmem_limit, 32 * _MIB), 56 * _MIB))

        out = pl.pallas_call(
            partial(_gram_rowblock_kernel, inv_total=inv_total, k_total=K,
                    tk=tk, mask_tail=mask_tail, compute_dtype=compute_dtype),
            out_shape=jax.ShapeDtypeStruct((M, M), jnp.float32),
            grid_spec=pltpu.PrefetchScalarGridSpec(
                num_scalar_prefetch=0,
                grid=grid,
                in_specs=[
                    pl.BlockSpec((tm, tk), lambda i, k: (i, k)),   # rows for this block
                    pl.BlockSpec((M, tk), lambda i, k: (0, k)),    # all rows, same K slice
                ],
                out_specs=pl.BlockSpec((tm, M), lambda i, k: (i, 0)),
            ),
            compiler_params=pltpu.CompilerParams(
                dimension_semantics=("parallel", "arbitrary"),
                vmem_limit_bytes=vmem_limit,
            ),
        )(feat, feat)

    return out.astype(x.dtype)


if __name__ == "__main__":
    key = jax.random.PRNGKey(0)

    # Primary check: small NCHW input consistent with the module (a, b, c, d).
    x = jax.random.normal(key, (2, 4, 16, 16), dtype=jnp.float32)
    gram = gram_matrix(x)
    jax.block_until_ready(gram)

    a, b, c, d = x.shape
    feat = x.reshape(a * b, c * d)
    ref = (feat @ feat.T) / (a * b * c * d)
    assert gram.shape == (a * b, a * b)
    assert jnp.allclose(gram, ref, atol=1e-5, rtol=1e-5)

    # Exercise the in-kernel K-tail masking path (K = 170 not a multiple of tk = 128).
    x2 = jax.random.normal(jax.random.PRNGKey(0), (2, 4, 10, 17), dtype=jnp.float32)
    gram2 = gram_matrix(x2, max_tk=128)
    jax.block_until_ready(gram2)
    a2, b2, c2, d2 = x2.shape
    feat2 = x2.reshape(a2 * b2, c2 * d2)
    ref2 = (feat2 @ feat2.T) / (a2 * b2 * c2 * d2)
    assert jnp.allclose(gram2, ref2, atol=1e-5, rtol=1e-5)

    # Exercise the large-M row-block fallback path on the small shape.
    gram3 = gram_matrix(x, use_resident=False)
    jax.block_until_ready(gram3)
    assert jnp.allclose(gram3, ref, atol=1e-5, rtol=1e-5)

    print("KERNEL_OK")
</pallas_src>

<mosaic_0001>
module attributes {stable_mosaic.version = 11 : i64} {
  func.func @_gram_resident_kernel(%arg0: i32, %arg1: memref<8x256xf32, #tpu.memory_space<vmem>>, %arg2: memref<8x8xf32, #tpu.memory_space<vmem>>) attributes {dimension_semantics = [#tpu.dimension_semantics<arbitrary>], iteration_bounds = array<i64: 1>, scalar_prefetch = 0 : i64, scratch_operands = 0 : i64, tpu.core_type = #tpu.core_type<tc>, window_params = [{transform_indices = @transform_0, window_bounds = array<i64: 8, 256>}, {pipeline_mode = #tpu.pipeline_mode<synchronous>, transform_indices = @transform_1, window_bounds = array<i64: 8, 8>}]} {
    %c0_i32 = arith.constant 0 : i32
    %0 = arith.cmpi eq, %arg0, %c0_i32 : i32
    %1 = arith.extui %0 : i1 to i32
    %c0_i32_0 = arith.constant 0 : i32
    %2 = arith.cmpi ne, %1, %c0_i32_0 : i32
    scf.if %2 {
      %cst_8 = arith.constant 0.000000e+00 : f32
      %11 = vector.broadcast %cst_8 : f32 to vector<8x8xf32>
      %c0_9 = arith.constant 0 : index
      %c0_10 = arith.constant 0 : index
      %12 = vector.load %arg2[%c0_9, %c0_10] : memref<8x8xf32, #tpu.memory_space<vmem>>, vector<8x8xf32>
      tpu.vector_store %arg2[%c0_9, %c0_10], %11 {strides = array<i32>} : memref<8x8xf32, #tpu.memory_space<vmem>>, vector<8x8xf32>,
    } else {
    }
    %c0 = arith.constant 0 : index
    %c0_1 = arith.constant 0 : index
    %3 = vector.load %arg1[%c0, %c0_1] : memref<8x256xf32, #tpu.memory_space<vmem>>, vector<8x256xf32>
    %c0_2 = arith.constant 0 : index
    %c0_3 = arith.constant 0 : index
    %4 = vector.load %arg2[%c0_2, %c0_3] : memref<8x8xf32, #tpu.memory_space<vmem>>, vector<8x8xf32>
    %cst = arith.constant dense<0.000000e+00> : vector<8x8xf32>
    %5 = tpu.matmul %3, %3, %cst {dimension_numbers = #tpu.dot_dimension_numbers<[1], [1], [0], [0], [0, 0, 1, 0], [], []>} : vector<8x256xf32>, vector<8x256xf32>, vector<8x8xf32> -> vector<8x8xf32>
    %6 = arith.addf %4, %5 : vector<8x8xf32>
    %c0_4 = arith.constant 0 : index
    %c0_5 = arith.constant 0 : index
    %7 = vector.load %arg2[%c0_4, %c0_5] : memref<8x8xf32, #tpu.memory_space<vmem>>, vector<8x8xf32>
    tpu.vector_store %arg2[%c0_4, %c0_5], %6 {strides = array<i32>} : memref<8x8xf32, #tpu.memory_space<vmem>>, vector<8x8xf32>,
    %c0_i32_6 = arith.constant 0 : i32
    %8 = arith.cmpi eq, %arg0, %c0_i32_6 : i32
    %9 = arith.extui %8 : i1 to i32
    %c0_i32_7 = arith.constant 0 : i32
    %10 = arith.cmpi ne, %9, %c0_i32_7 : i32
    scf.if %10 {
      %c0_8 = arith.constant 0 : index
      %c0_9 = arith.constant 0 : index
      %11 = vector.load %arg2[%c0_8, %c0_9] : memref<8x8xf32, #tpu.memory_space<vmem>>, vector<8x8xf32>
      %cst_10 = arith.constant 4.8828125E-4 : f32
      %12 = vector.broadcast %cst_10 : f32 to vector<8x8xf32>
      %13 = arith.mulf %11, %12 : vector<8x8xf32>
      %c0_11 = arith.constant 0 : index
      %c0_12 = arith.constant 0 : index
      %14 = vector.load %arg2[%c0_11, %c0_12] : memref<8x8xf32, #tpu.memory_space<vmem>>, vector<8x8xf32>
      tpu.vector_store %arg2[%c0_11, %c0_12], %13 {strides = array<i32>} : memref<8x8xf32, #tpu.memory_space<vmem>>, vector<8x8xf32>,
    } else {
    }
    return
  }
  func.func @transform_0(%arg0: i32) -> (i32, i32) {
    %c0_i32 = arith.constant 0 : i32
    %c0_i32_0 = arith.constant 0 : i32
    return %c0_i32, %arg0 : i32, i32
  }
  func.func @transform_1(%arg0: i32) -> (i32, i32) {
    %c0_i32 = arith.constant 0 : i32
    %c0_i32_0 = arith.constant 0 : i32
    %c0_i32_1 = arith.constant 0 : i32
    return %c0_i32, %c0_i32_0 : i32, i32
  }
}

</mosaic_0001>

<llo_original>
// kernel: tpu_custom_call.1
$region0: #{tpu_custom_call.1}
  #allocation0 [shape = 'u32[]', space=smem, size = 0x4, offset = 0x4, fixed_abs, tag = 'smem constant byte address 0x4 - core index']
  #allocation1 [shape = 'u32[72,128]{1,0:T(1,128)}', space=vmem, size = 0x9000, scoped, tag = 'internal scratch']
  %s0 = inlined_call_operand.hbm [shape: f32[8,256], index: 0, kind: input, shape index: {}]
  %s1 = inlined_call_operand.hbm [shape: f32[8,8], index: 1, kind: output, shape index: {}]
  %s2 = sld [smem:[#allocation0]]
  $region26: #{tpu_custom_call.1} parent=0
    _
  %s4 = ssub.s32 1, %s2
  %s5 = scalar_select 0, %s4, %s2
  $region1: #{tpu_custom_call.1} parent=0
    #allocation2 [shape = 'u8[8192]{0}', space=vmem, size = 0x2000, scoped, tag = 'input window, operand 0, single buffered']
    #allocation3 [shape = 's32[1]{0}', space=sflag, size = 0x4, scoped, tag = 'scoped memory for tpu_custom_call.1']
    #allocation4 [shape = 's32[1]{0}', space=sflag, size = 0x4, scoped, tag = 'scoped memory for tpu_custom_call.1']
    #allocation5 [shape = 'u8[4096]{0}', space=vmem, size = 0x1000, scoped, tag = 'output window, operand 0, single buffered']
    %6 = vsyncpa [#allocation3], 0
    %7 = vsyncpa [#allocation4], 0
    // Predicated region
    $region2: #{tpu_custom_call.1} parent=1 // pred_check
      _
    $region3: #{tpu_custom_call.1} parent=1 // pred_check_branch
      %9 = sbr.rel (0) target = $region5
    $region4: #{tpu_custom_call.1} parent=1 // pred_region
      %11 = vsyncadd [#allocation3], 0
      %s13 = sshll.u32 %s0, 4
      %s14 = int_to_ptr.hbm [resolvable:$true] %s13
      %s15 = sshll.u32 [#allocation2], 4
      %s16 = int_to_ptr.vmem [resolvable:$true] %s15
      %18 = dma.hbm_to_vmem [thread:$0]  %s14, 256, %s16, [#allocation3]
    $region5: #{tpu_custom_call.1} parent=1 // pred_fallthru
      _
    // Predicated region
    $region6: #{tpu_custom_call.1} parent=1 // pred_check
      _
    $region7: #{tpu_custom_call.1} parent=1 // pred_check_branch
      %20 = sbr.rel (0) target = $region9
    $region8: #{tpu_custom_call.1} parent=1 // pred_region
      %22 = dma.done [#allocation3], 256
    $region9: #{tpu_custom_call.1} parent=1 // pred_fallthru
      _
    %p23 = scmp.eq.s32.totalorder 0, 0
    // Predicated region
    $region10: #{tpu_custom_call.1} parent=1 // pred_check
      %p24 = pneg %p23
    $region11: #{tpu_custom_call.1} parent=1 // pred_check_branch
      %26 = sbr.rel (%p24) target = $region13
    $region12: #{tpu_custom_call.1} parent=1 // pred_region
      %vm27 = vcmask 64512
      %28 = vst.msk [vmem:[#allocation5] sm:$0xff] %vm27, 0.0
    $region13: #{tpu_custom_call.1} parent=1 // pred_fallthru
      _
    %v29 = vld [vmem:[#allocation2] sm:$0xff]
    %v30 = vld [vmem:[#allocation2 + $0x8] sm:$0xff]
    %v31 = vld [vmem:[#allocation5] sm:$0xff]
    %32 = vmatpush.xpose.msra.mxu0 0.0
    %33 = vmatpush.xpose.msra.mxu0 0.0
    %34 = vmatpush.xpose.msra.mxu0 0.0
    %35 = vmatpush.xpose.msra.mxu0 0.0
    %36 = vmatpush.xpose.msra.mxu0 0.0
    %37 = vmatpush.xpose.msra.mxu0 0.0
    %38 = vmatpush.xpose.msra.mxu0 0.0
    %39 = vmatpush.xpose.msra.mxu0 0.0
    %40 = vmatpush.xpose.msra.mxu0 0.0
    %41 = vmatpush.xpose.msra.mxu0 0.0
    %42 = vmatpush.xpose.msra.mxu0 0.0
    %43 = vmatpush.xpose.msra.mxu0 0.0
    %44 = vmatpush.xpose.msra.mxu0 0.0
    %45 = vmatpush.xpose.msra.mxu0 0.0
    %46 = vmatpush.xpose.msra.mxu0 0.0
    %47 = vmatpush.xpose.msra.mxu0 %v29
    %48 = vmatmul.f32.gmra.mxu0 %v29
    %v49 = vpop.f32.mrf.mxu0
    %v50 = vadd.f32 0.0, %v49
    %51 = vdwg.mxu0
    %52 = vmatpush.xpose.msra.mxu0 0.0
    %53 = vmatpush.xpose.msra.mxu0 0.0
    %54 = vmatpush.xpose.msra.mxu0 0.0
    %55 = vmatpush.xpose.msra.mxu0 0.0
    %56 = vmatpush.xpose.msra.mxu0 0.0
    %57 = vmatpush.xpose.msra.mxu0 0.0
    %58 = vmatpush.xpose.msra.mxu0 0.0
    %59 = vmatpush.xpose.msra.mxu0 0.0
    %60 = vmatpush.xpose.msra.mxu0 0.0
    %61 = vmatpush.xpose.msra.mxu0 0.0
    %62 = vmatpush.xpose.msra.mxu0 0.0
    %63 = vmatpush.xpose.msra.mxu0 0.0
    %64 = vmatpush.xpose.msra.mxu0 0.0
    %65 = vmatpush.xpose.msra.mxu0 0.0
    %66 = vmatpush.xpose.msra.mxu0 0.0
    %67 = vmatpush.xpose.msra.mxu0 %v30
    %68 = vmatmul.f32.gmra.mxu0 %v30
    %v69 = vpop.f32.mrf.mxu0
    %v70 = vadd.f32 %v50, %v69
    %71 = vdwg.mxu0
    %v72 = vadd.f32 %v31, %v70
    %vm73 = vcmask 64512
    %74 = vst.msk [vmem:[#allocation5] sm:$0xff] %vm73, %v72
    // Predicated region
    $region14: #{tpu_custom_call.1} parent=1 // pred_check
      %p75 = pneg %p23
    $region15: #{tpu_custom_call.1} parent=1 // pred_check_branch
      %77 = sbr.rel (%p75) target = $region17
    $region16: #{tpu_custom_call.1} parent=1 // pred_region
      %v78 = vld [vmem:[#allocation5] sm:$0xff]
      %v79 = vmul.f32 %v78, 0.00048828125
      %80 = vst.msk [vmem:[#allocation5] sm:$0xff] %vm73, %v79
    $region17: #{tpu_custom_call.1} parent=1 // pred_fallthru
      _
    // Predicated region
    $region18: #{tpu_custom_call.1} parent=1 // pred_check
      _
    $region19: #{tpu_custom_call.1} parent=1 // pred_check_branch
      %82 = sbr.rel (0) target = $region21
    $region20: #{tpu_custom_call.1} parent=1 // pred_region
      %84 = vsyncadd [#allocation4], 0
      %s86 = sshll.u32 [#allocation5], 4
      %s87 = int_to_ptr.vmem [resolvable:$true] %s86
      %s88 = sshll.u32 %s1, 4
      %s89 = int_to_ptr.hbm [resolvable:$true] %s88
      %91 = dma.vmem_to_hbm [thread:$0]  %s87, 128, %s89, [#allocation4]
    $region21: #{tpu_custom_call.1} parent=1 // pred_fallthru
      _
    // Predicated region
    $region22: #{tpu_custom_call.1} parent=1 // pred_check
      _
    $region23: #{tpu_custom_call.1} parent=1 // pred_check_branch
      %93 = sbr.rel (0) target = $region25
    $region24: #{tpu_custom_call.1} parent=1 // pred_region
      %95 = dma.done [#allocation4], 128
    $region25: #{tpu_custom_call.1} parent=1 // pred_fallthru
      _
    %96 = vsyncpa [#allocation3], 1
    %97 = vsyncpa [#allocation4], 1

</llo_original>
